<compile_context>
chip_gen: v7x
topology: tpu7x:2x2x1
jax: 0.10.0
libtpu: 0.0.40
codegen_flags: <defaults>
</compile_context>

<pallas_src>
import jax
import jax.numpy as jnp
from jax.experimental import pallas as pl
from jax.experimental.pallas import tpu as pltpu


def _gelu_tanh(x):
    # tanh-approximate GELU (nn.GELU(approximate='tanh') form).  tanh lands on
    # the EUP slot; running it in bf16 packs 2 elems/lane on v6e/v7x.
    c = 0.7978845608028654  # sqrt(2/pi)
    return 0.5 * x * (1.0 + jnp.tanh(c * (x + 0.044715 * (x * x * x))))


def _make_ffn_kernel(compute_dtype, has_mask, single_k):
    """Trace-time specialized kernel: with/without mask, resident/streamed d_ff."""

    def kernel(*refs):
        if has_mask:
            if single_k:
                x_ref, w1_ref, b1_ref, w2_ref, b2_ref, keep_ref, o_ref = refs
                acc_ref = None
            else:
                x_ref, w1_ref, b1_ref, w2_ref, b2_ref, keep_ref, o_ref, acc_ref = refs
        else:
            keep_ref = None
            if single_k:
                x_ref, w1_ref, b1_ref, w2_ref, b2_ref, o_ref = refs
                acc_ref = None
            else:
                x_ref, w1_ref, b1_ref, w2_ref, b2_ref, o_ref, acc_ref = refs

        # (TM, D) f32 tile -> bf16 in-kernel (hidden under MXU), then MXU matmul
        # with f32 accumulation over the current d_ff chunk.
        xb = x_ref[...].astype(compute_dtype)
        h = jnp.dot(xb, w1_ref[...], preferred_element_type=jnp.float32)
        # Bias in f32, GELU in bf16 (MXU-ready for the second matmul).
        h = _gelu_tanh((h + b1_ref[...]).astype(compute_dtype))
        # TODO(synk): training-mode dropout not implemented (identity == eval()).
        part = jnp.dot(h, w2_ref[...], preferred_element_type=jnp.float32)

        def finalize(y):
            y = y + b2_ref[...]
            if has_mask:
                # PyTorch: out[~(mask.sum(-1) > 0)] = 0  -> multiply rows by keep.
                y = y * keep_ref[...]
            o_ref[...] = y.astype(o_ref.dtype)

        if single_k:
            finalize(part)
        else:
            k = pl.program_id(1)

            @pl.when(k == 0)
            def _():
                acc_ref[...] = jnp.zeros_like(acc_ref)

            acc_ref[...] += part

            @pl.when(k == pl.num_programs(1) - 1)
            def _():
                finalize(acc_ref[...])

    return kernel


def _round_up(n, m):
    return ((n + m - 1) // m) * m


def positionwise_feed_forward(x, w1, b1, w2, b2, mask=None, *,
                              compute_dtype=jnp.bfloat16,
                              block_m=256, block_ff=None, out_dtype=None):
    """x: [B, S, d_model]; w1: [d_model, d_ff]; b1: [d_ff];
    w2: [d_ff, d_model]; b2: [d_model]; mask: [B, S, L] (optional).

    block_ff=None keeps W1/W2 fully resident in VMEM (best for v5e/v6e and
    small/medium models); set block_ff (e.g. 1024) on v7x / very large d_ff to
    stream d_ff chunks through an f32 accumulator instead.
    out_dtype=jnp.bfloat16 halves store/writeback bytes if the consumer accepts it.
    """
    B, S, D = x.shape
    d_ff = w1.shape[1]
    M = B * S
    out_dtype = x.dtype if out_dtype is None else out_dtype

    # Row tile: multiple of 8 (sublane); 256+ keeps the 256-wide MXU fed.
    tm = min(block_m, _round_up(M, 8))
    Mp = _round_up(M, tm)

    # d_ff chunking (streaming path only when block_ff is given).
    t_ff = d_ff if block_ff is None else min(block_ff, d_ff)
    Fp = _round_up(d_ff, t_ff)
    n_k = Fp // t_ff
    single_k = (n_k == 1)
    has_mask = mask is not None

    # x stays in the caller's dtype; cast to bf16 happens inside the kernel.
    x2 = x.reshape(M, D)
    if Mp != M:
        # Padded rows are sliced off below (and zeroed by keep when masked).
        x2 = jnp.pad(x2, ((0, Mp - M), (0, 0)))

    w1c = w1.astype(compute_dtype)
    w2c = w2.astype(compute_dtype)
    b1_2d = b1.reshape(1, d_ff).astype(jnp.float32)
    b2_2d = b2.reshape(1, D).astype(jnp.float32)
    if Fp != d_ff:
        # Zero-padded d_ff contributes nothing: GELU(0)=0 and W2 pad rows are 0.
        w1c = jnp.pad(w1c, ((0, 0), (0, Fp - d_ff)))
        b1_2d = jnp.pad(b1_2d, ((0, 0), (0, Fp - d_ff)))
        w2c = jnp.pad(w2c, ((0, Fp - d_ff), (0, 0)))

    if has_mask:
        # Per-row keep flag precomputed outside the kernel: no O(M*L) DMA and
        # no per-row cross-lane reduce inside the kernel.
        keep = (mask.reshape(M, -1).sum(axis=-1) > 0).astype(jnp.float32)
        keep = keep.reshape(M, 1)
        if Mp != M:
            keep = jnp.pad(keep, ((0, Mp - M), (0, 0)))

    # ---- BlockSpecs --------------------------------------------------------
    resident = pl.Buffered(1)  # constant index_map -> single VMEM buffer
    x_spec = pl.BlockSpec((tm, D), lambda i, k: (i, 0))
    if single_k:
        w1_spec = pl.BlockSpec((D, Fp), lambda i, k: (0, 0), pipeline_mode=resident)
        b1_spec = pl.BlockSpec((1, Fp), lambda i, k: (0, 0), pipeline_mode=resident)
        w2_spec = pl.BlockSpec((Fp, D), lambda i, k: (0, 0), pipeline_mode=resident)
    else:
        w1_spec = pl.BlockSpec((D, t_ff), lambda i, k: (0, k))
        b1_spec = pl.BlockSpec((1, t_ff), lambda i, k: (0, k))
        w2_spec = pl.BlockSpec((t_ff, D), lambda i, k: (k, 0))
    b2_spec = pl.BlockSpec((1, D), lambda i, k: (0, 0), pipeline_mode=resident)
    out_spec = pl.BlockSpec((tm, D), lambda i, k: (i, 0))

    in_specs = [x_spec, w1_spec, b1_spec, w2_spec, b2_spec]
    inputs = [x2, w1c, b1_2d, w2c, b2_2d]
    if has_mask:
        in_specs.append(pl.BlockSpec((tm, 1), lambda i, k: (i, 0)))
        inputs.append(keep)

    scratch_shapes = [] if single_k else [pltpu.VMEM((tm, D), jnp.float32)]

    # ---- Explicit VMEM budget (review item) --------------------------------
    def nbytes(shape, dtype, bufs):
        n = 1
        for s in shape:
            n *= s
        return n * jnp.dtype(dtype).itemsize * bufs

    wt_bufs = 1 if single_k else 2   # resident vs double-buffered along k
    footprint = (
        nbytes((tm, D), x.dtype, 2)                   # x tile (double-buffered)
        + nbytes((D, t_ff), compute_dtype, wt_bufs)   # W1 chunk
        + nbytes((1, t_ff), jnp.float32, wt_bufs)     # b1 chunk
        + nbytes((t_ff, D), compute_dtype, wt_bufs)   # W2 chunk
        + nbytes((1, D), jnp.float32, 1)              # b2 (resident)
        + nbytes((tm, D), out_dtype, 2)               # out tile (double-buffered)
        + nbytes((tm, t_ff), jnp.float32, 1)          # h f32 temp
        + nbytes((tm, t_ff), compute_dtype, 1)        # h bf16 temp
        + nbytes((tm, D), jnp.float32, 1)             # accumulator / y temp
        + (nbytes((tm, 1), jnp.float32, 2) if has_mask else 0)
    )
    # Floor at the default scoped limit; cap well under v5e/v6e physical.  On
    # v7x (64 MiB/TC) pass block_ff so the computed footprint stays small.
    vmem_limit = max(min(int(footprint * 1.5) + (4 << 20), 96 << 20), 32 << 20)

    flops = 4 * Mp * D * Fp  # two matmuls, 2*M*N*K each
    bytes_accessed = (
        Mp * D * x.dtype.itemsize
        + 2 * D * Fp * jnp.dtype(compute_dtype).itemsize
        + (Fp + D) * 4
        + Mp * D * jnp.dtype(out_dtype).itemsize
        + (Mp * 4 if has_mask else 0)
    )

    kernel = _make_ffn_kernel(compute_dtype, has_mask, single_k)

    out = pl.pallas_call(
        kernel,
        out_shape=jax.ShapeDtypeStruct((Mp, D), out_dtype),
        grid_spec=pltpu.PrefetchScalarGridSpec(
            num_scalar_prefetch=0,
            grid=(Mp // tm, n_k),                 # reduction (d_ff) axis last
            in_specs=in_specs,
            out_specs=out_spec,
            scratch_shapes=scratch_shapes,
        ),
        compiler_params=pltpu.CompilerParams(
            dimension_semantics=("parallel", "arbitrary"),
            vmem_limit_bytes=vmem_limit,
        ),
        cost_estimate=pl.CostEstimate(
            flops=flops, transcendentals=Mp * Fp, bytes_accessed=bytes_accessed),
    )(*inputs)

    return out[:M].reshape(B, S, D)


def _ref_ffn(x, w1, b1, w2, b2, mask, compute_dtype=jnp.bfloat16):
    """Pure-JAX reference on the same bf16 compute path (apples to apples)."""
    B, S, D = x.shape
    xb = x.reshape(B * S, D).astype(compute_dtype)
    h = jnp.dot(xb, w1.astype(compute_dtype),
                preferred_element_type=jnp.float32) + b1[None, :]
    h = _gelu_tanh(h.astype(compute_dtype))
    y = jnp.dot(h, w2.astype(compute_dtype),
                preferred_element_type=jnp.float32) + b2[None, :]
    if mask is not None:
        keep = (mask.reshape(B * S, -1).sum(axis=-1) > 0).astype(jnp.float32)[:, None]
        y = y * keep
    return y.astype(x.dtype).reshape(B, S, D)


if __name__ == "__main__":
    # Small but lane-dense shapes (d_model, d_ff multiples of 128).  NOTE:
    # production tuning (block_m=512 on v6e, block_ff on v7x) needs real
    # shapes (M in the thousands, D/d_ff >= 512); this is a correctness demo.
    B, S, d_model, d_ff = 2, 16, 128, 256

    key = jax.random.PRNGKey(0)
    kx, kw1, kb1, kw2, kb2 = jax.random.split(key, 5)

    # Deterministic synthetic parameters (nn.Linear weights stored transposed).
    w1 = jax.random.normal(kw1, (d_model, d_ff), jnp.float32) * (1.0 / jnp.sqrt(d_model))
    b1 = jax.random.normal(kb1, (d_ff,), jnp.float32) * 0.01
    w2 = jax.random.normal(kw2, (d_ff, d_model), jnp.float32) * (1.0 / jnp.sqrt(d_ff))
    b2 = jax.random.normal(kb2, (d_model,), jnp.float32) * 0.01

    x = jax.random.normal(kx, (B, S, d_model), jnp.float32)

    # Mask [B, S, S]: zero out the last two sequence positions of batch 1.
    mask = jnp.ones((B, S, S), jnp.float32)
    mask = mask.at[1, 14:, :].set(0.0)

    # 1) Resident-weight path, with mask.
    y1 = jax.block_until_ready(positionwise_feed_forward(x, w1, b1, w2, b2, mask))
    # 2) d_ff-streaming path (accumulator kernel), with mask.
    y2 = jax.block_until_ready(
        positionwise_feed_forward(x, w1, b1, w2, b2, mask, block_ff=128))
    # 3) mask=None fast path (no keep input / multiply).
    y3 = jax.block_until_ready(positionwise_feed_forward(x, w1, b1, w2, b2, None))

    y_ref = _ref_ffn(x, w1, b1, w2, b2, mask)
    y_ref_nm = _ref_ffn(x, w1, b1, w2, b2, None)

    assert y1.shape == (B, S, d_model)
    assert jnp.allclose(y1, y_ref, atol=2e-2, rtol=2e-2), \
        float(jnp.max(jnp.abs(y1 - y_ref)))
    assert jnp.allclose(y2, y_ref, atol=2e-2, rtol=2e-2), \
        float(jnp.max(jnp.abs(y2 - y_ref)))
    assert jnp.allclose(y3, y_ref_nm, atol=2e-2, rtol=2e-2), \
        float(jnp.max(jnp.abs(y3 - y_ref_nm)))
    # Masked rows of the OUTPUT must be exactly zero (PyTorch x[~mask] = 0).
    assert bool(jnp.all(y1[1, 14:, :] == 0.0))
    assert bool(jnp.all(y2[1, 14:, :] == 0.0))

    print("KERNEL_OK")
</pallas_src>

<mosaic_0001>
module attributes {stable_mosaic.version = 11 : i64} {
  func.func @kernel(%arg0: i32, %arg1: i32, %arg2: memref<32x128xf32, #tpu.memory_space<vmem>>, %arg3: memref<128x256xbf16, #tpu.memory_space<vmem>>, %arg4: memref<1x256xf32, #tpu.memory_space<vmem>>, %arg5: memref<256x128xbf16, #tpu.memory_space<vmem>>, %arg6: memref<1x128xf32, #tpu.memory_space<vmem>>, %arg7: memref<32x1xf32, #tpu.memory_space<vmem>>, %arg8: memref<32x128xf32, #tpu.memory_space<vmem>>) attributes {dimension_semantics = [#tpu.dimension_semantics<parallel>, #tpu.dimension_semantics<arbitrary>], iteration_bounds = array<i64: 1, 1>, scalar_prefetch = 0 : i64, scratch_operands = 0 : i64, tpu.core_type = #tpu.core_type<tc>, window_params = [{transform_indices = @transform_0, window_bounds = array<i64: 32, 128>}, {pipeline_mode = #tpu.pipeline_mode<synchronous>, transform_indices = @transform_1, window_bounds = array<i64: 128, 256>}, {pipeline_mode = #tpu.pipeline_mode<synchronous>, transform_indices = @transform_2, window_bounds = array<i64: 1, 256>}, {pipeline_mode = #tpu.pipeline_mode<synchronous>, transform_indices = @transform_3, window_bounds = array<i64: 256, 128>}, {pipeline_mode = #tpu.pipeline_mode<synchronous>, transform_indices = @transform_4, window_bounds = array<i64: 1, 128>}, {transform_indices = @transform_5, window_bounds = array<i64: 32, 1>}, {transform_indices = @transform_6, window_bounds = array<i64: 32, 128>}]} {
    %c0 = arith.constant 0 : index
    %c0_0 = arith.constant 0 : index
    %0 = vector.load %arg2[%c0, %c0_0] : memref<32x128xf32, #tpu.memory_space<vmem>>, vector<32x128xf32>
    %1 = arith.truncf %0 : vector<32x128xf32> to vector<32x128xbf16>
    %c0_1 = arith.constant 0 : index
    %c0_2 = arith.constant 0 : index
    %2 = vector.load %arg3[%c0_1, %c0_2] : memref<128x256xbf16, #tpu.memory_space<vmem>>, vector<128x256xbf16>
    %cst = arith.constant dense<0.000000e+00> : vector<32x256xf32>
    %3 = tpu.matmul %1, %2, %cst {dimension_numbers = #tpu.dot_dimension_numbers<[1], [0], [0], [1], [0, 0, 1, 1], [], []>} : vector<32x128xbf16>, vector<128x256xbf16>, vector<32x256xf32> -> vector<32x256xf32>
    %c0_3 = arith.constant 0 : index
    %c0_4 = arith.constant 0 : index
    %4 = vector.load %arg4[%c0_3, %c0_4] : memref<1x256xf32, #tpu.memory_space<vmem>>, vector<1x256xf32>
    %5 = vector.broadcast %4 : vector<1x256xf32> to vector<32x256xf32>
    %6 = arith.addf %3, %5 : vector<32x256xf32>
    %7 = arith.truncf %6 : vector<32x256xf32> to vector<32x256xbf16>
    %cst_5 = arith.constant 5.000000e-01 : bf16
    %8 = vector.broadcast %cst_5 : bf16 to vector<32x256xbf16>
    %9 = arith.mulf %8, %7 : vector<32x256xbf16>
    %10 = arith.mulf %7, %7 : vector<32x256xbf16>
    %11 = arith.mulf %10, %7 : vector<32x256xbf16>
    %cst_6 = arith.constant 4.467770e-02 : bf16
    %12 = vector.broadcast %cst_6 : bf16 to vector<32x256xbf16>
    %13 = arith.mulf %12, %11 : vector<32x256xbf16>
    %14 = arith.addf %7, %13 : vector<32x256xbf16>
    %cst_7 = arith.constant 7.968750e-01 : bf16
    %15 = vector.broadcast %cst_7 : bf16 to vector<32x256xbf16>
    %16 = arith.mulf %15, %14 : vector<32x256xbf16>
    %17 = math.tanh %16 : vector<32x256xbf16>
    %cst_8 = arith.constant 1.000000e+00 : bf16
    %18 = vector.broadcast %cst_8 : bf16 to vector<32x256xbf16>
    %19 = arith.addf %18, %17 : vector<32x256xbf16>
    %20 = arith.mulf %9, %19 : vector<32x256xbf16>
    %c0_9 = arith.constant 0 : index
    %c0_10 = arith.constant 0 : index
    %21 = vector.load %arg5[%c0_9, %c0_10] : memref<256x128xbf16, #tpu.memory_space<vmem>>, vector<256x128xbf16>
    %cst_11 = arith.constant dense<0.000000e+00> : vector<32x128xf32>
    %22 = tpu.matmul %20, %21, %cst_11 {dimension_numbers = #tpu.dot_dimension_numbers<[1], [0], [0], [1], [0, 0, 1, 1], [], []>} : vector<32x256xbf16>, vector<256x128xbf16>, vector<32x128xf32> -> vector<32x128xf32>
    %c0_12 = arith.constant 0 : index
    %c0_13 = arith.constant 0 : index
    %23 = vector.load %arg6[%c0_12, %c0_13] : memref<1x128xf32, #tpu.memory_space<vmem>>, vector<1x128xf32>
    %24 = vector.broadcast %23 : vector<1x128xf32> to vector<32x128xf32>
    %25 = arith.addf %22, %24 : vector<32x128xf32>
    %c0_14 = arith.constant 0 : index
    %c0_15 = arith.constant 0 : index
    %26 = vector.load %arg7[%c0_14, %c0_15] : memref<32x1xf32, #tpu.memory_space<vmem>>, vector<32x1xf32>
    %27 = vector.broadcast %26 : vector<32x1xf32> to vector<32x128xf32>
    %28 = arith.mulf %25, %27 : vector<32x128xf32>
    %c0_16 = arith.constant 0 : index
    %c0_17 = arith.constant 0 : index
    %29 = vector.load %arg8[%c0_16, %c0_17] : memref<32x128xf32, #tpu.memory_space<vmem>>, vector<32x128xf32>
    tpu.vector_store %arg8[%c0_16, %c0_17], %28 {strides = array<i32>} : memref<32x128xf32, #tpu.memory_space<vmem>>, vector<32x128xf32>,
    return
  }
  func.func @transform_0(%arg0: i32, %arg1: i32) -> (i32, i32) {
    %c0_i32 = arith.constant 0 : i32
    %c0_i32_0 = arith.constant 0 : i32
    return %arg0, %c0_i32 : i32, i32
  }
  func.func @transform_1(%arg0: i32, %arg1: i32) -> (i32, i32) {
    %c0_i32 = arith.constant 0 : i32
    %c0_i32_0 = arith.constant 0 : i32
    %c0_i32_1 = arith.constant 0 : i32
    return %c0_i32, %c0_i32_0 : i32, i32
  }
  func.func @transform_2(%arg0: i32, %arg1: i32) -> (i32, i32) {
    %c0_i32 = arith.constant 0 : i32
    %c0_i32_0 = arith.constant 0 : i32
    %c0_i32_1 = arith.constant 0 : i32
    return %c0_i32, %c0_i32_0 : i32, i32
  }
  func.func @transform_3(%arg0: i32, %arg1: i32) -> (i32, i32) {
    %c0_i32 = arith.constant 0 : i32
    %c0_i32_0 = arith.constant 0 : i32
    %c0_i32_1 = arith.constant 0 : i32
    return %c0_i32, %c0_i32_0 : i32, i32
  }
  func.func @transform_4(%arg0: i32, %arg1: i32) -> (i32, i32) {
    %c0_i32 = arith.constant 0 : i32
    %c0_i32_0 = arith.constant 0 : i32
    %c0_i32_1 = arith.constant 0 : i32
    return %c0_i32, %c0_i32_0 : i32, i32
  }
  func.func @transform_5(%arg0: i32, %arg1: i32) -> (i32, i32) {
    %c0_i32 = arith.constant 0 : i32
    %c0_i32_0 = arith.constant 0 : i32
    return %arg0, %c0_i32 : i32, i32
  }
  func.func @transform_6(%arg0: i32, %arg1: i32) -> (i32, i32) {
    %c0_i32 = arith.constant 0 : i32
    %c0_i32_0 = arith.constant 0 : i32
    return %arg0, %c0_i32 : i32, i32
  }
}

</mosaic_0001>

<llo_original>
// kernel: tpu_custom_call.1
$region0: #{tpu_custom_call.1}
  #allocation0 [shape = 'u32[]', space=smem, size = 0x4, offset = 0x4, fixed_abs, tag = 'smem constant byte address 0x4 - core index']
  #allocation1 [shape = 'u32[144,128]{1,0:T(1,128)}', space=vmem, size = 0x12000, scoped, tag = 'internal scratch']
  %s0 = inlined_call_operand.vmem [shape: f32[32,128], index: 0, kind: input, shape index: {}]
  %s1 = inlined_call_operand.hbm [shape: bf16[128,256], index: 1, kind: input, shape index: {}]
  %s2 = inlined_call_operand.vmem [shape: f32[1,256], index: 2, kind: input, shape index: {}]
  %s3 = inlined_call_operand.hbm [shape: bf16[256,128], index: 3, kind: input, shape index: {}]
  %s4 = inlined_call_operand.vmem [shape: f32[1,128], index: 4, kind: input, shape index: {}]
  %s5 = inlined_call_operand.vmem [shape: f32[32,1], index: 5, kind: input, shape index: {}]
  %s6 = inlined_call_operand.hbm [shape: f32[32,128], index: 6, kind: output, shape index: {}]
  %s7 = sld [smem:[#allocation0]]
  $region42: #{tpu_custom_call.1} parent=0
    _
  %s9 = ssub.s32 1, %s7
  %s10 = scalar_select 0, %s9, %s7
  $region1: #{tpu_custom_call.1} parent=0
    #allocation2 [shape = 'u8[65536]{0}', space=vmem, size = 0x10000, scoped, tag = 'input window, operand 1, single buffered']
    #allocation3 [shape = 's32[1]{0}', space=sflag, size = 0x4, scoped, tag = 'scoped memory for tpu_custom_call.1']
    #allocation4 [shape = 's32[1]{0}', space=sflag, size = 0x4, scoped, tag = 'scoped memory for tpu_custom_call.1']
    #allocation5 [shape = 'u8[65536]{0}', space=vmem, size = 0x10000, scoped, tag = 'input window, operand 3, single buffered']
    #allocation6 [shape = 's32[1]{0}', space=sflag, size = 0x4, scoped, tag = 'scoped memory for tpu_custom_call.1']
    #allocation7 [shape = 'u8[16384]{0}', space=vmem, size = 0x4000, scoped, tag = 'output window, operand 0, single buffered']
    %11 = vsyncpa [#allocation3], 0
    %12 = vsyncpa [#allocation6], 0
    %13 = vsyncpa [#allocation4], 0
    // Predicated region
    $region2: #{tpu_custom_call.1} parent=1 // pred_check
      _
    $region3: #{tpu_custom_call.1} parent=1 // pred_check_branch
      %15 = sbr.rel (0) target = $region5
    $region4: #{tpu_custom_call.1} parent=1 // pred_region
      _
    $region5: #{tpu_custom_call.1} parent=1 // pred_fallthru
      _
    // Predicated region
    $region6: #{tpu_custom_call.1} parent=1 // pred_check
      _
    $region7: #{tpu_custom_call.1} parent=1 // pred_check_branch
      %17 = sbr.rel (0) target = $region9
    $region8: #{tpu_custom_call.1} parent=1 // pred_region
      %s19 = ssub.s32 2048, 2048
      %20 = vsyncadd [#allocation3], %s19
      %s21 = sshll.u32 [#allocation2], 4
      %s22 = int_to_ptr.vmem [resolvable:$true] %s21
      %27 = dma.hbm_to_vmem [thread:$0]  %s1, 2048, %s22, [#allocation3], 128, 128, 8
    $region9: #{tpu_custom_call.1} parent=1 // pred_fallthru
      _
    // Predicated region
    $region10: #{tpu_custom_call.1} parent=1 // pred_check
      _
    $region11: #{tpu_custom_call.1} parent=1 // pred_check_branch
      %29 = sbr.rel (0) target = $region13
    $region12: #{tpu_custom_call.1} parent=1 // pred_region
      _
    $region13: #{tpu_custom_call.1} parent=1 // pred_fallthru
      _
    // Predicated region
    $region14: #{tpu_custom_call.1} parent=1 // pred_check
      _
    $region15: #{tpu_custom_call.1} parent=1 // pred_check_branch
      %31 = sbr.rel (0) target = $region17
    $region16: #{tpu_custom_call.1} parent=1 // pred_region
      %s33 = ssub.s32 2048, 2048
      %34 = vsyncadd [#allocation6], %s33
      %s35 = sshll.u32 [#allocation5], 4
      %s36 = int_to_ptr.vmem [resolvable:$true] %s35
      %41 = dma.hbm_to_vmem [thread:$0]  %s3, 2048, %s36, [#allocation6], 64, 64, 4
    $region17: #{tpu_custom_call.1} parent=1 // pred_fallthru
      _
    // Predicated region
    $region18: #{tpu_custom_call.1} parent=1 // pred_check
      _
    $region19: #{tpu_custom_call.1} parent=1 // pred_check_branch
      %43 = sbr.rel (0) target = $region21
    $region20: #{tpu_custom_call.1} parent=1 // pred_region
      _
    $region21: #{tpu_custom_call.1} parent=1 // pred_fallthru
      _
    // Predicated region
    $region22: #{tpu_custom_call.1} parent=1 // pred_check
      _
    $region23: #{tpu_custom_call.1} parent=1 // pred_check_branch
      %45 = sbr.rel (0) target = $region25
    $region24: #{tpu_custom_call.1} parent=1 // pred_region
      _
    $region25: #{tpu_custom_call.1} parent=1 // pred_fallthru
      _
    // Predicated region
    $region26: #{tpu_custom_call.1} parent=1 // pred_check
      _
    $region27: #{tpu_custom_call.1} parent=1 // pred_check_branch
      %47 = sbr.rel (0) target = $region29
    $region28: #{tpu_custom_call.1} parent=1 // pred_region
      %48 = dma.done [#allocation3], 2048
    $region29: #{tpu_custom_call.1} parent=1 // pred_fallthru
      _
    // Predicated region
    $region30: #{tpu_custom_call.1} parent=1 // pred_check
      _
    $region31: #{tpu_custom_call.1} parent=1 // pred_check_branch
      %50 = sbr.rel (0) target = $region33
    $region32: #{tpu_custom_call.1} parent=1 // pred_region
      %51 = dma.done [#allocation6], 2048
    $region33: #{tpu_custom_call.1} parent=1 // pred_fallthru
      _
    %v57 = vld [vmem:[%s0] sm:$0xff]
    %v58 = vld [vmem:[%s0 + $0x8] sm:$0xff]
    %v59 = vld [vmem:[%s0 + $0x10] sm:$0xff]
    %v60 = vld [vmem:[%s0 + $0x18] sm:$0xff]
    %v61 = vpack.c.bf16 %v58, %v57
    %v62 = vpack.c.bf16 %v60, %v59
    %v63 = vld [vmem:[#allocation2] sm:$0xff]
    %v64 = vld [vmem:[#allocation2 + $0x8] sm:$0xff]
    %v65 = vld [vmem:[#allocation2 + $0x10] sm:$0xff]
    %v66 = vld [vmem:[#allocation2 + $0x18] sm:$0xff]
    %v67 = vld [vmem:[#allocation2 + $0x20] sm:$0xff]
    %v68 = vld [vmem:[#allocation2 + $0x28] sm:$0xff]
    %v69 = vld [vmem:[#allocation2 + $0x30] sm:$0xff]
    %v70 = vld [vmem:[#allocation2 + $0x38] sm:$0xff]
    %v71 = vld [vmem:[#allocation2 + $0x40] sm:$0xff]
    %v72 = vld [vmem:[#allocation2 + $0x48] sm:$0xff]
    %v73 = vld [vmem:[#allocation2 + $0x50] sm:$0xff]
    %v74 = vld [vmem:[#allocation2 + $0x58] sm:$0xff]
    %v75 = vld [vmem:[#allocation2 + $0x60] sm:$0xff]
    %v76 = vld [vmem:[#allocation2 + $0x68] sm:$0xff]
    %v77 = vld [vmem:[#allocation2 + $0x70] sm:$0xff]
    %v78 = vld [vmem:[#allocation2 + $0x78] sm:$0xff]
    %v79 = vld [vmem:[%s2] sm:$0x3]
    %v81 = vlaneseq
    %v82 = vshrl.u32 %v81, 7
    %v83 = vsub.s32 0, %v82
    %v84 = vrot.slane %v79, %v83
    %v85 = vlaneseq
    %v86 = vshrl.u32 %v85, 7
    %v87 = vsub.s32 1, %v86
    %v88 = vrot.slane %v79, %v87
    %v107 = vunpack.c.l.b16 %v63
    %v108 = vunpack.c.h.b16 %v63
    %v109 = vunpack.c.l.b16 %v64
    %v110 = vunpack.c.h.b16 %v64
    %v111 = vunpack.c.l.b16 %v65
    %v112 = vunpack.c.h.b16 %v65
    %v113 = vunpack.c.l.b16 %v66
    %v114 = vunpack.c.h.b16 %v66
    %v115 = vunpack.c.l.b16 %v67
    %v116 = vunpack.c.h.b16 %v67
    %v117 = vunpack.c.l.b16 %v68
    %v118 = vunpack.c.h.b16 %v68
    %v119 = vunpack.c.l.b16 %v69
    %v120 = vunpack.c.h.b16 %v69
    %v121 = vunpack.c.l.b16 %v70
    %v122 = vunpack.c.h.b16 %v70
    %v123 = vunpack.c.l.b16 %v71
    %v124 = vunpack.c.h.b16 %v71
    %v125 = vunpack.c.l.b16 %v72
    %v126 = vunpack.c.h.b16 %v72
    %v127 = vunpack.c.l.b16 %v73
    %v128 = vunpack.c.h.b16 %v73
    %v129 = vunpack.c.l.b16 %v74
    %v130 = vunpack.c.h.b16 %v74
    %v131 = vunpack.c.l.b16 %v75
    %v132 = vunpack.c.h.b16 %v75
    %v133 = vunpack.c.l.b16 %v76
    %v134 = vunpack.c.h.b16 %v76
    %v135 = vunpack.c.l.b16 %v77
    %v136 = vunpack.c.h.b16 %v77
    %v137 = vunpack.c.l.b16 %v78
    %v138 = vunpack.c.h.b16 %v78
    %v139 = vpack.c.b16 %v109, %v107
    %v140 = vpack.c.b16 %v110, %v108
    %v141 = vpack.c.b16 %v113, %v111
    %v142 = vpack.c.b16 %v114, %v112
    %v143 = vpack.c.b16 %v117, %v115
    %v144 = vpack.c.b16 %v118, %v116
    %v145 = vpack.c.b16 %v121, %v119
    %v146 = vpack.c.b16 %v122, %v120
    %v147 = vpack.c.b16 %v125, %v123
    %v148 = vpack.c.b16 %v126, %v124
    %v149 = vpack.c.b16 %v129, %v127
    %v150 = vpack.c.b16 %v130, %v128
    %v151 = vpack.c.b16 %v133, %v131
    %v152 = vpack.c.b16 %v134, %v132
    %v153 = vpack.c.b16 %v137, %v135
    %v154 = vpack.c.b16 %v138, %v136
    %171 = vmatprep.subr.bf16.mxu0 %v140
    %172 = vmatpush1.bf16.msra.mxu0 %v139
    %173 = vmatprep.subr.bf16.mxu0 %v142
    %174 = vmatpush1.bf16.msra.mxu0 %v141
    %175 = vmatprep.subr.bf16.mxu0 %v144
    %176 = vmatpush1.bf16.msra.mxu0 %v143
    %177 = vmatprep.subr.bf16.mxu0 %v146
    %178 = vmatpush1.bf16.msra.mxu0 %v145
    %179 = vmatprep.subr.bf16.mxu0 %v148
    %180 = vmatpush1.bf16.msra.mxu0 %v147
    %181 = vmatprep.subr.bf16.mxu0 %v150
    %182 = vmatpush1.bf16.msra.mxu0 %v149
    %183 = vmatprep.subr.bf16.mxu0 %v152
    %184 = vmatpush1.bf16.msra.mxu0 %v151
    %185 = vmatprep.subr.bf16.mxu0 %v154
    %186 = vmatpush1.bf16.msra.mxu0 %v153
    %187 = vmatprep.subr.bf16.mxu0 0
    %188 = vmatpush1.bf16.msra.mxu0 0
    %189 = vmatprep.subr.bf16.mxu0 0
    %190 = vmatpush1.bf16.msra.mxu0 0
    %191 = vmatprep.subr.bf16.mxu0 0
    %192 = vmatpush1.bf16.msra.mxu0 0
    %193 = vmatprep.subr.bf16.mxu0 0
    %194 = vmatpush1.bf16.msra.mxu0 0
    %195 = vmatprep.subr.bf16.mxu0 0
    %196 = vmatpush1.bf16.msra.mxu0 0
    %197 = vmatprep.subr.bf16.mxu0 0
    %198 = vmatpush1.bf16.msra.mxu0 0
    %199 = vmatprep.subr.bf16.mxu0 0
    %200 = vmatpush1.bf16.msra.mxu0 0
    %201 = vmatprep.subr.bf16.mxu0 0
    %202 = vmatpush1.bf16.msra.mxu0 0
    %203 = vmatprep.mubr.bf16.mxu0 0
    %204 = vmatmul.mubr.bf16.gmra.mrb[0].mxu0 %v61
    %v205 = vpop.f32.mrb[0].mxu0
    %v206 = vadd.f32 %v84, %v205
    %v207 = vpop.f32.mrb[0].mxu0
    %v208 = vadd.f32 %v88, %v207
    %v209 = vpop.f32.mrb[0].mxu0
    %v210 = vadd.f32 %v84, %v209
    %v211 = vpop.f32.mrb[0].mxu0
    %v212 = vadd.f32 %v88, %v211
    %213 = vmatprep.mubr.bf16.mxu0 0
    %214 = vmatmul.mubr.bf16.gmra.mrb[0].mxu0 %v62
    %v215 = vpop.f32.mrb[0].mxu0
    %v216 = vadd.f32 %v84, %v215
    %v217 = vpop.f32.mrb[0].mxu0
    %v218 = vadd.f32 %v88, %v217
    %v219 = vpop.f32.mrb[0].mxu0
    %v220 = vadd.f32 %v84, %v219
    %v221 = vpop.f32.mrb[0].mxu0
    %v222 = vadd.f32 %v88, %v221
    %223 = vdwg.mxu0
    %v224 = vpack.c.bf16 %v210, %v206
    %v225 = vpack.c.bf16 %v212, %v208
    %v226 = vpack.c.bf16 %v220, %v216
    %v227 = vpack.c.bf16 %v222, %v218
    %v228 = vmul.bf16 %v224, 1056980736
    %v229 = vmul.bf16 %v225, 1056980736
    %v230 = vmul.bf16 %v226, 1056980736
    %v231 = vmul.bf16 %v227, 1056980736
    %v232 = vmul.bf16 %v224, %v224
    %v233 = vmul.bf16 %v225, %v225
    %v234 = vmul.bf16 %v226, %v226
    %v235 = vmul.bf16 %v227, %v227
    %v236 = vmul.bf16 %v232, %v224
    %v237 = vmul.bf16 %v233, %v225
    %v238 = vmul.bf16 %v234, %v226
    %v239 = vmul.bf16 %v235, %v227
    %v240 = vmul.bf16 %v236, 1027030327
    %v241 = vmul.bf16 %v237, 1027030327
    %v242 = vmul.bf16 %v238, 1027030327
    %v243 = vmul.bf16 %v239, 1027030327
    %v244 = vadd.bf16 %v224, %v240
    %v245 = vadd.bf16 %v225, %v241
    %v246 = vadd.bf16 %v226, %v242
    %v247 = vadd.bf16 %v227, %v243
    %v248 = vmul.bf16 %v244, 1061961548
    %v249 = vmul.bf16 %v245, 1061961548
    %v250 = vmul.bf16 %v246, 1061961548
    %v251 = vmul.bf16 %v247, 1061961548
    %v252 = vtanh.bf16.pop %v248
    %v253 = vtanh.bf16.pop %v249
    %v254 = vtanh.bf16.pop %v250
    %v255 = vtanh.bf16.pop %v251
    %v256 = vadd.bf16 %v252, 1065369472
    %v257 = vadd.bf16 %v253, 1065369472
    %v258 = vadd.bf16 %v254, 1065369472
    %v259 = vadd.bf16 %v255, 1065369472
    %v260 = vmul.bf16 %v228, %v256
    %v261 = vmul.bf16 %v229, %v257
    %v262 = vmul.bf16 %v230, %v258
    %v263 = vmul.bf16 %v231, %v259
    %v264 = vld [vmem:[#allocation5] sm:$0xf]
    %v265 = vld [vmem:[#allocation5 + $0x4] sm:$0xf]
    %v266 = vld [vmem:[#allocation5 + $0x8] sm:$0xf]
    %v267 = vld [vmem:[#allocation5 + $0xc] sm:$0xf]
    %v268 = vld [vmem:[#allocation5 + $0x10] sm:$0xf]
    %v269 = vld [vmem:[#allocation5 + $0x14] sm:$0xf]
    %v270 = vld [vmem:[#allocation5 + $0x18] sm:$0xf]
    %v271 = vld [vmem:[#allocation5 + $0x1c] sm:$0xf]
    %v272 = vld [vmem:[#allocation5 + $0x20] sm:$0xf]
    %v273 = vld [vmem:[#allocation5 + $0x24] sm:$0xf]
    %v274 = vld [vmem:[#allocation5 + $0x28] sm:$0xf]
    %v275 = vld [vmem:[#allocation5 + $0x2c] sm:$0xf]
    %v276 = vld [vmem:[#allocation5 + $0x30] sm:$0xf]
    %v277 = vld [vmem:[#allocation5 + $0x34] sm:$0xf]
    %v278 = vld [vmem:[#allocation5 + $0x38] sm:$0xf]
    %v279 = vld [vmem:[#allocation5 + $0x3c] sm:$0xf]
    %v280 = vld [vmem:[#allocation5 + $0x40] sm:$0xf]
    %v281 = vld [vmem:[#allocation5 + $0x44] sm:$0xf]
    %v282 = vld [vmem:[#allocation5 + $0x48] sm:$0xf]
    %v283 = vld [vmem:[#allocation5 + $0x4c] sm:$0xf]
    %v284 = vld [vmem:[#allocation5 + $0x50] sm:$0xf]
    %v285 = vld [vmem:[#allocation5 + $0x54] sm:$0xf]
    %v286 = vld [vmem:[#allocation5 + $0x58] sm:$0xf]
    %v287 = vld [vmem:[#allocation5 + $0x5c] sm:$0xf]
    %v288 = vld [vmem:[#allocation5 + $0x60] sm:$0xf]
    %v289 = vld [vmem:[#allocation5 + $0x64] sm:$0xf]
    %v290 = vld [vmem:[#allocation5 + $0x68] sm:$0xf]
    %v291 = vld [vmem:[#allocation5 + $0x6c] sm:$0xf]
    %v292 = vld [vmem:[#allocation5 + $0x70] sm:$0xf]
    %v293 = vld [vmem:[#allocation5 + $0x74] sm:$0xf]
    %v294 = vld [vmem:[#allocation5 + $0x78] sm:$0xf]
    %v295 = vld [vmem:[#allocation5 + $0x7c] sm:$0xf]
    %v296 = vld [vmem:[%s4] sm:$0x1]
    %v298 = vlaneseq
    %v299 = vshrl.u32 %v298, 7
    %v300 = vsub.s32 0, %v299
    %v301 = vrot.slane %v296, %v300
    %v335 = vunpack.c.l.b16 %v264
    %v336 = vunpack.c.l.b16 %v265
    %v337 = vunpack.c.l.b16 %v266
    %v338 = vunpack.c.l.b16 %v267
    %v339 = vunpack.c.l.b16 %v268
    %v340 = vunpack.c.l.b16 %v269
    %v341 = vunpack.c.l.b16 %v270
    %v342 = vunpack.c.l.b16 %v271
    %v343 = vunpack.c.l.b16 %v272
    %v344 = vunpack.c.l.b16 %v273
    %v345 = vunpack.c.l.b16 %v274
    %v346 = vunpack.c.l.b16 %v275
    %v347 = vunpack.c.l.b16 %v276
    %v348 = vunpack.c.l.b16 %v277
    %v349 = vunpack.c.l.b16 %v278
    %v350 = vunpack.c.l.b16 %v279
    %v351 = vunpack.c.l.b16 %v280
    %v352 = vunpack.c.l.b16 %v281
    %v353 = vunpack.c.l.b16 %v282
    %v354 = vunpack.c.l.b16 %v283
    %v355 = vunpack.c.l.b16 %v284
    %v356 = vunpack.c.l.b16 %v285
    %v357 = vunpack.c.l.b16 %v286
    %v358 = vunpack.c.l.b16 %v287
    %v359 = vunpack.c.l.b16 %v288
    %v360 = vunpack.c.l.b16 %v289
    %v361 = vunpack.c.l.b16 %v290
    %v362 = vunpack.c.l.b16 %v291
    %v363 = vunpack.c.l.b16 %v292
    %v364 = vunpack.c.l.b16 %v293
    %v365 = vunpack.c.l.b16 %v294
    %v366 = vunpack.c.l.b16 %v295
    %v367 = vpack.c.b16 %v336, %v335
    %v368 = vpack.c.b16 %v338, %v337
    %v369 = vpack.c.b16 %v340, %v339
    %v370 = vpack.c.b16 %v342, %v341
    %v371 = vpack.c.b16 %v344, %v343
    %v372 = vpack.c.b16 %v346, %v345
    %v373 = vpack.c.b16 %v348, %v347
    %v374 = vpack.c.b16 %v350, %v349
    %v375 = vpack.c.b16 %v352, %v351
    %v376 = vpack.c.b16 %v354, %v353
    %v377 = vpack.c.b16 %v356, %v355
    %v378 = vpack.c.b16 %v358, %v357
    %v379 = vpack.c.b16 %v360, %v359
    %v380 = vpack.c.b16 %v362, %v361
    %v381 = vpack.c.b16 %v364, %v363
    %v382 = vpack.c.b16 %v366, %v365
    %399 = vmatprep.subr.bf16.mxu0 0
    %400 = vmatpush1.bf16.msra.mxu0 %v367
    %401 = vmatprep.subr.bf16.mxu0 0
    %402 = vmatpush1.bf16.msra.mxu0 %v368
    %403 = vmatprep.subr.bf16.mxu0 0
    %404 = vmatpush1.bf16.msra.mxu0 %v369
    %405 = vmatprep.subr.bf16.mxu0 0
    %406 = vmatpush1.bf16.msra.mxu0 %v370
    %407 = vmatprep.subr.bf16.mxu0 0
    %408 = vmatpush1.bf16.msra.mxu0 %v371
    %409 = vmatprep.subr.bf16.mxu0 0
    %410 = vmatpush1.bf16.msra.mxu0 %v372
    %411 = vmatprep.subr.bf16.mxu0 0
    %412 = vmatpush1.bf16.msra.mxu0 %v373
    %413 = vmatprep.subr.bf16.mxu0 0
    %414 = vmatpush1.bf16.msra.mxu0 %v374
    %415 = vmatprep.subr.bf16.mxu0 0
    %416 = vmatpush1.bf16.msra.mxu0 %v375
    %417 = vmatprep.subr.bf16.mxu0 0
    %418 = vmatpush1.bf16.msra.mxu0 %v376
    %419 = vmatprep.subr.bf16.mxu0 0
    %420 = vmatpush1.bf16.msra.mxu0 %v377
    %421 = vmatprep.subr.bf16.mxu0 0
    %422 = vmatpush1.bf16.msra.mxu0 %v378
    %423 = vmatprep.subr.bf16.mxu0 0
    %424 = vmatpush1.bf16.msra.mxu0 %v379
    %425 = vmatprep.subr.bf16.mxu0 0
    %426 = vmatpush1.bf16.msra.mxu0 %v380
    %427 = vmatprep.subr.bf16.mxu0 0
    %428 = vmatpush1.bf16.msra.mxu0 %v381
    %429 = vmatprep.subr.bf16.mxu0 0
    %430 = vmatpush1.bf16.msra.mxu0 %v382
    %431 = vmatprep.mubr.bf16.mxu0 %v261
    %432 = vmatmul.mubr.bf16.gmra.mrb[0].mxu0 %v260
    %v433 = vpop.f32.mrb[0].mxu0
    %v434 = vadd.f32 %v301, %v433
    %v435 = vpop.f32.mrb[0].mxu0
    %v436 = vpop.f32.mrb[0].mxu0
    %v437 = vadd.f32 %v301, %v436
    %v438 = vpop.f32.mrb[0].mxu0
    %439 = vmatprep.mubr.bf16.mxu0 %v263
    %440 = vmatmul.mubr.bf16.gmra.mrb[0].mxu0 %v262
    %v441 = vpop.f32.mrb[0].mxu0
    %v442 = vadd.f32 %v301, %v441
    %v443 = vpop.f32.mrb[0].mxu0
    %v444 = vpop.f32.mrb[0].mxu0
    %v445 = vadd.f32 %v301, %v444
    %v446 = vpop.f32.mrb[0].mxu0
    %447 = vdwg.mxu0
    %v448 = vld [vmem:[%s5] sm:$0xff]
    %v449 = vld [vmem:[%s5 + $0x8] sm:$0xff]
    %v450 = vld [vmem:[%s5 + $0x10] sm:$0xff]
    %v451 = vld [vmem:[%s5 + $0x18] sm:$0xff]
    %453 = vset.pattern.permute.xlu0 0
    %454 = vperm.xlu0 %453, %v448
    %v455 = vpop.permute.xlu0 %454
    %458 = vset.pattern.permute.xlu0 0
    %459 = vperm.xlu0 %458, %v449
    %v460 = vpop.permute.xlu0 %459
    %463 = vset.pattern.permute.xlu0 0
    %464 = vperm.xlu0 %463, %v450
    %v465 = vpop.permute.xlu0 %464
    %468 = vset.pattern.permute.xlu0 0
    %469 = vperm.xlu0 %468, %v451
    %v470 = vpop.permute.xlu0 %469
    %v472 = vmul.f32 %v434, %v455
    %v473 = vmul.f32 %v437, %v460
    %v474 = vmul.f32 %v442, %v465
    %v475 = vmul.f32 %v445, %v470
    %476 = vst [vmem:[#allocation7] sm:$0xff] %v472
    %477 = vst [vmem:[#allocation7 + $0x8] sm:$0xff] %v473
    %478 = vst [vmem:[#allocation7 + $0x10] sm:$0xff] %v474
    %479 = vst [vmem:[#allocation7 + $0x18] sm:$0xff] %v475
    // Predicated region
    $region34: #{tpu_custom_call.1} parent=1 // pred_check
      _
    $region35: #{tpu_custom_call.1} parent=1 // pred_check_branch
      %481 = sbr.rel (0) target = $region37
    $region36: #{tpu_custom_call.1} parent=1 // pred_region
      %s483 = ssub.s32 512, 512
      %484 = vsyncadd [#allocation4], %s483
      %s485 = sshll.u32 [#allocation7], 4
      %s486 = int_to_ptr.vmem [resolvable:$true] %s485
      %491 = dma.vmem_to_hbm [thread:$0]  %s486, 512, %s6, [#allocation4], 128, 128, 8
    $region37: #{tpu_custom_call.1} parent=1 // pred_fallthru
      _
    // Predicated region
    $region38: #{tpu_custom_call.1} parent=1 // pred_check
      _
    $region39: #{tpu_custom_call.1} parent=1 // pred_check_branch
      %493 = sbr.rel (0) target = $region41
    $region40: #{tpu_custom_call.1} parent=1 // pred_region
      %494 = dma.done [#allocation4], 512
    $region41: #{tpu_custom_call.1} parent=1 // pred_fallthru
      _
    %495 = vsyncpa [#allocation3], 1
    %496 = vsyncpa [#allocation6], 1
    %497 = vsyncpa [#allocation4], 1

</llo_original>
